<compile_context>
chip_gen: v7x
topology: tpu7x:2x2x1
jax: 0.10.0
libtpu: 0.0.40
codegen_flags: <defaults>
</compile_context>

<pallas_src>
import functools

import jax
import jax.numpy as jnp
from jax.experimental import pallas as pl
from jax.experimental.pallas import tpu as pltpu


def _round_up(x, m):
    return ((x + m - 1) // m) * m


def _cdiv(a, b):
    return (a + b - 1) // b


def _vmem_capacity_bytes():
    """Physical VMEM per core (64 MiB on v7x, 128 MiB on v5e/v6e); conservative fallback."""
    try:
        cap = getattr(pltpu.get_tpu_info(), "vmem_capacity_bytes", None)
        if cap:
            return int(cap)
    except Exception:
        pass
    return 64 * 1024 * 1024


def _spec(block_shape, index_map, *, single_buffered=False):
    """BlockSpec; single-buffer resident operands (constant index_map) when supported."""
    if single_buffered:
        try:
            return pl.BlockSpec(block_shape, index_map, pipeline_mode=pl.Buffered(1))
        except Exception:  # older jax without pipeline_mode / Buffered
            pass
    return pl.BlockSpec(block_shape, index_map)


def _classifier_kernel(x_ref, w_ref, b_ref, o_ref):
    # x: [TB, D] (any dtype), w: [D, TN] (pre-fused, pre-transposed, compute dtype),
    # b: [1, TN] fp32.  One MXU pass with fp32 accumulation; bias broadcast-add on VPU.
    x = x_ref[...].astype(w_ref.dtype)
    acc = jnp.dot(x, w_ref[...], preferred_element_type=jnp.float32)
    o_ref[...] = (acc + b_ref[...]).astype(o_ref.dtype)


def prepare_classifier_params(w1, b1, w2, b2, *, compute_dtype=jnp.bfloat16):
    """One-time weight preparation (mirrors Classfier.fuse()); call at load time.

    Folds the two distillation heads exactly by linearity:
        W_avg = (W1 + W2) / 2,  b_avg = (b1 + b2) / 2,
    pre-transposes to [D, Cp] and zero-pads the class dim to a lane-friendly multiple
    so the kernel's output store is lane-dense.

    Returns (w_fused [D, Cp] compute_dtype, b_fused [1, Cp] fp32, num_classes).
    """
    C, D = w1.shape
    w_avg = 0.5 * (w1.astype(jnp.float32) + w2.astype(jnp.float32))   # [C, D]
    b_avg = 0.5 * (b1.astype(jnp.float32) + b2.astype(jnp.float32))   # [C]
    # Full MXU width (256) on v6e/v7x for large (compute-bound) heads; 128 otherwise.
    lane = 256 if C >= 1024 else 128
    Cp = _round_up(max(C, 1), lane)
    w_fused = jnp.zeros((D, Cp), compute_dtype).at[:, :C].set(w_avg.T.astype(compute_dtype))
    b_fused = jnp.zeros((1, Cp), jnp.float32).at[0, :C].set(b_avg)
    return w_fused, b_fused, C


def classifier_forward(x, w_fused, b_fused, num_classes, *, block_b=2048,
                       class_block=1024, out_dtype=None):
    """Classfier forward: ((x @ W1.T + b1) + (x @ W2.T + b2)) / 2 with heads pre-folded.

    x: [B, D]   w_fused: [D, Cp]   b_fused: [1, Cp]   ->   [B, num_classes]
    """
    B, D = x.shape
    Dw, Cp = w_fused.shape
    assert Dw == D, (Dw, D)
    assert b_fused.shape == (1, Cp), b_fused.shape
    out_dtype = x.dtype if out_dtype is None else out_dtype

    x_bytes = jnp.dtype(x.dtype).itemsize
    w_bytes = jnp.dtype(w_fused.dtype).itemsize
    o_bytes = jnp.dtype(out_dtype).itemsize

    # ---- Per-generation VMEM budget (leave headroom for compiler-internal scratch).
    capacity = _vmem_capacity_bytes()
    budget = capacity - max(16 * 1024 * 1024, capacity // 8)

    # ---- Class tile TN: keep the head resident when it fits; otherwise stream (D, TN)
    #      weight blocks (double-buffered) over a second grid axis.
    TN = min(Cp, _round_up(max(class_block, 128), 128))
    while TN > 128 and 2 * D * TN * w_bytes > budget // 2:
        TN = max(128, _round_up(TN // 2, 128))
    grid_n = _cdiv(Cp, TN)
    w_resident = grid_n == 1
    w_bufs = 1 if w_resident else 2

    # ---- Batch tile TB: >= 2 grid steps when possible (v7x megacore), multiple of 8,
    #      shrunk until the streamed x/out tiles fit the budget.
    if B <= 8:
        TB = B
    else:
        TB = max(8, min(block_b, _round_up(_cdiv(B, 2), 8)))

    def _est(tb):
        return (2 * tb * D * x_bytes + 2 * tb * TN * o_bytes
                + w_bufs * D * TN * w_bytes + w_bufs * TN * 4)

    while TB > 8 and _est(TB) > budget:
        TB = max(8, _round_up(TB // 2, 8))

    grid_b = _cdiv(B, TB)
    vmem_limit = int(min(capacity - 2 * 1024 * 1024,
                         max(_est(TB) * 3 // 2, 32 * 1024 * 1024)))

    w_fetches = 1 if w_resident else grid_b
    cost = pl.CostEstimate(
        flops=2 * B * D * Cp,
        transcendentals=0,
        bytes_accessed=int(B * D * x_bytes + w_fetches * D * Cp * w_bytes
                           + B * Cp * o_bytes + w_fetches * Cp * 4),
    )

    out = pl.pallas_call(
        _classifier_kernel,
        out_shape=jax.ShapeDtypeStruct((B, Cp), out_dtype),
        grid=(grid_b, grid_n),
        in_specs=[
            pl.BlockSpec((TB, D), lambda i, j: (i, 0)),                       # x: streamed over batch
            _spec((D, TN), lambda i, j: (0, j), single_buffered=w_resident),  # fused weight
            _spec((1, TN), lambda i, j: (0, j), single_buffered=w_resident),  # fused bias (fp32)
        ],
        out_specs=pl.BlockSpec((TB, TN), lambda i, j: (i, j)),
        compiler_params=pltpu.CompilerParams(
            dimension_semantics=("parallel", "parallel"),
            vmem_limit_bytes=vmem_limit,
        ),
        cost_estimate=cost,
    )(x, w_fused, b_fused)

    # No batch padding happened; skip the class slice entirely when Cp == num_classes.
    return out if Cp == num_classes else out[:, :num_classes]


def init_params(key, dim, num_classes):
    """Deterministic init mimicking nn.Linear default (uniform +/- 1/sqrt(dim))."""
    k1, k2, k3, k4 = jax.random.split(key, 4)
    bound = 1.0 / (dim ** 0.5)
    w1 = jax.random.uniform(k1, (num_classes, dim), jnp.float32, -bound, bound)
    b1 = jax.random.uniform(k2, (num_classes,), jnp.float32, -bound, bound)
    w2 = jax.random.uniform(k3, (num_classes, dim), jnp.float32, -bound, bound)
    b2 = jax.random.uniform(k4, (num_classes,), jnp.float32, -bound, bound)
    return w1, b1, w2, b2


if __name__ == "__main__":
    key = jax.random.PRNGKey(0)

    def ref_fwd(x, w1, b1, w2, b2):
        return ((x @ w1.T + b1) + (x @ w2.T + b2)) * 0.5

    # --- Test 1: tiny shapes, fp32 compute (tight vs. reference). --------------------
    B, dim, C = 8, 32, 16
    kx, kp = jax.random.split(key)
    x = jax.random.normal(kx, (B, dim), jnp.float32)
    w1, b1, w2, b2 = init_params(kp, dim, C)

    wf32, bf32, _ = prepare_classifier_params(w1, b1, w2, b2, compute_dtype=jnp.float32)
    fwd = jax.jit(functools.partial(classifier_forward, num_classes=C))
    out = jax.block_until_ready(fwd(x, wf32, bf32))
    ref = ref_fwd(x, w1, b1, w2, b2)
    assert out.shape == (B, C), out.shape
    assert jnp.allclose(out, ref, atol=1e-5, rtol=1e-5), float(jnp.max(jnp.abs(out - ref)))

    # --- Test 2: partial last batch tile + default bf16 compute path (loose tol). ----
    B2 = 40
    kx2, _ = jax.random.split(kx)
    x2 = jax.random.normal(kx2, (B2, dim), jnp.float32)
    wbf, bbf, _ = prepare_classifier_params(w1, b1, w2, b2)   # bf16 fused weight
    out2 = jax.block_until_ready(fwd(x2, wbf, bbf))
    ref2 = ref_fwd(x2, w1, b1, w2, b2)
    assert out2.shape == (B2, C), out2.shape
    assert jnp.allclose(out2, ref2, atol=5e-2, rtol=5e-2), float(jnp.max(jnp.abs(out2 - ref2)))

    # --- Test 3: class-tiled (streaming-weight) path, class padding + slice. ---------
    C3 = 200
    _, kp3 = jax.random.split(kp)
    w1c, b1c, w2c, b2c = init_params(kp3, dim, C3)
    wc, bc, _ = prepare_classifier_params(w1c, b1c, w2c, b2c, compute_dtype=jnp.float32)
    fwd_tiled = jax.jit(functools.partial(classifier_forward, num_classes=C3, class_block=128))
    out3 = jax.block_until_ready(fwd_tiled(x2, wc, bc))
    ref3 = ref_fwd(x2, w1c, b1c, w2c, b2c)
    assert out3.shape == (B2, C3), out3.shape
    assert jnp.allclose(out3, ref3, atol=1e-5, rtol=1e-5), float(jnp.max(jnp.abs(out3 - ref3)))

    print("KERNEL_OK")
</pallas_src>

<mosaic_0001>
module attributes {stable_mosaic.version = 11 : i64} {
  func.func @_classifier_kernel(%arg0: i32, %arg1: i32, %arg2: memref<8x32xf32, #tpu.memory_space<vmem>>, %arg3: memref<32x128xf32, #tpu.memory_space<vmem>>, %arg4: memref<1x128xf32, #tpu.memory_space<vmem>>, %arg5: memref<8x128xf32, #tpu.memory_space<vmem>>) attributes {dimension_semantics = [#tpu.dimension_semantics<parallel>, #tpu.dimension_semantics<parallel>], iteration_bounds = array<i64: 1, 1>, scalar_prefetch = 0 : i64, scratch_operands = 0 : i64, tpu.core_type = #tpu.core_type<tc>, window_params = [{transform_indices = @transform_0, window_bounds = array<i64: 8, 32>}, {pipeline_mode = #tpu.pipeline_mode<synchronous>, transform_indices = @transform_1, window_bounds = array<i64: 32, 128>}, {pipeline_mode = #tpu.pipeline_mode<synchronous>, transform_indices = @transform_2, window_bounds = array<i64: 1, 128>}, {transform_indices = @transform_3, window_bounds = array<i64: 8, 128>}]} {
    %c0 = arith.constant 0 : index
    %c0_0 = arith.constant 0 : index
    %0 = vector.load %arg2[%c0, %c0_0] : memref<8x32xf32, #tpu.memory_space<vmem>>, vector<8x32xf32>
    %c0_1 = arith.constant 0 : index
    %c0_2 = arith.constant 0 : index
    %1 = vector.load %arg3[%c0_1, %c0_2] : memref<32x128xf32, #tpu.memory_space<vmem>>, vector<32x128xf32>
    %cst = arith.constant dense<0.000000e+00> : vector<8x128xf32>
    %2 = tpu.matmul %0, %1, %cst {dimension_numbers = #tpu.dot_dimension_numbers<[1], [0], [0], [1], [0, 0, 1, 1], [], []>} : vector<8x32xf32>, vector<32x128xf32>, vector<8x128xf32> -> vector<8x128xf32>
    %c0_3 = arith.constant 0 : index
    %c0_4 = arith.constant 0 : index
    %3 = vector.load %arg4[%c0_3, %c0_4] : memref<1x128xf32, #tpu.memory_space<vmem>>, vector<1x128xf32>
    %4 = vector.broadcast %3 : vector<1x128xf32> to vector<8x128xf32>
    %5 = arith.addf %2, %4 : vector<8x128xf32>
    %c0_5 = arith.constant 0 : index
    %c0_6 = arith.constant 0 : index
    %6 = vector.load %arg5[%c0_5, %c0_6] : memref<8x128xf32, #tpu.memory_space<vmem>>, vector<8x128xf32>
    tpu.vector_store %arg5[%c0_5, %c0_6], %5 {strides = array<i32>} : memref<8x128xf32, #tpu.memory_space<vmem>>, vector<8x128xf32>,
    return
  }
  func.func @transform_0(%arg0: i32, %arg1: i32) -> (i32, i32) {
    %c0_i32 = arith.constant 0 : i32
    %c0_i32_0 = arith.constant 0 : i32
    return %arg0, %c0_i32 : i32, i32
  }
  func.func @transform_1(%arg0: i32, %arg1: i32) -> (i32, i32) {
    %c0_i32 = arith.constant 0 : i32
    %c0_i32_0 = arith.constant 0 : i32
    return %c0_i32, %arg1 : i32, i32
  }
  func.func @transform_2(%arg0: i32, %arg1: i32) -> (i32, i32) {
    %c0_i32 = arith.constant 0 : i32
    %c0_i32_0 = arith.constant 0 : i32
    return %c0_i32, %arg1 : i32, i32
  }
  func.func @transform_3(%arg0: i32, %arg1: i32) -> (i32, i32) {
    %c0_i32 = arith.constant 0 : i32
    return %arg0, %arg1 : i32, i32
  }
}

</mosaic_0001>

<llo_original>
// kernel: classifier_forward.1
$region0: #{classifier_forward.1}
  #allocation0 [shape = 'u32[]', space=smem, size = 0x4, offset = 0x4, fixed_abs, tag = 'smem constant byte address 0x4 - core index']
  #allocation1 [shape = 'u32[144,128]{1,0:T(1,128)}', space=vmem, size = 0x12000, scoped, tag = 'internal scratch']
  %s0 = inlined_call_operand.hbm [shape: f32[8,32], index: 0, kind: input, shape index: {}]
  %s1 = inlined_call_operand.hbm [shape: f32[32,128], index: 1, kind: input, shape index: {}]
  %s2 = inlined_call_operand.vmem [shape: f32[1,128], index: 2, kind: input, shape index: {}]
  %s3 = inlined_call_operand.hbm [shape: f32[8,128], index: 3, kind: output, shape index: {}]
  %s4 = sld [smem:[#allocation0]]
  $region30: #{classifier_forward.1} parent=0
    _
  %s6 = ssub.s32 1, %s4
  %s7 = scalar_select 0, %s6, %s4
  $region1: #{classifier_forward.1} parent=0
    #allocation2 [shape = 'u8[4096]{0}', space=vmem, size = 0x1000, scoped, tag = 'input window, operand 0, single buffered']
    #allocation3 [shape = 's32[1]{0}', space=sflag, size = 0x4, scoped, tag = 'scoped memory for classifier_forward.1']
    #allocation4 [shape = 's32[1]{0}', space=sflag, size = 0x4, scoped, tag = 'scoped memory for classifier_forward.1']
    #allocation5 [shape = 'u8[16384]{0}', space=vmem, size = 0x4000, scoped, tag = 'input window, operand 1, single buffered']
    #allocation6 [shape = 's32[1]{0}', space=sflag, size = 0x4, scoped, tag = 'scoped memory for classifier_forward.1']
    #allocation7 [shape = 'u8[4096]{0}', space=vmem, size = 0x1000, scoped, tag = 'output window, operand 0, single buffered']
    %8 = vsyncpa [#allocation3], 0
    %9 = vsyncpa [#allocation6], 0
    %10 = vsyncpa [#allocation4], 0
    // Predicated region
    $region2: #{classifier_forward.1} parent=1 // pred_check
      _
    $region3: #{classifier_forward.1} parent=1 // pred_check_branch
      %12 = sbr.rel (0) target = $region5
    $region4: #{classifier_forward.1} parent=1 // pred_region
      %s14 = ssub.s32 128, 128
      %15 = vsyncadd [#allocation3], %s14
      %s17 = sshll.u32 [#allocation2], 4
      %s18 = int_to_ptr.vmem [resolvable:$true] %s17
      %20 = dma.hbm_to_vmem [thread:$0]  %s0, 128, %s18, [#allocation3]
    $region5: #{classifier_forward.1} parent=1 // pred_fallthru
      _
    // Predicated region
    $region6: #{classifier_forward.1} parent=1 // pred_check
      _
    $region7: #{classifier_forward.1} parent=1 // pred_check_branch
      %22 = sbr.rel (0) target = $region9
    $region8: #{classifier_forward.1} parent=1 // pred_region
      %s24 = ssub.s32 512, 512
      %25 = vsyncadd [#allocation6], %s24
      %s26 = sshll.u32 [#allocation5], 4
      %s27 = int_to_ptr.vmem [resolvable:$true] %s26
      %32 = dma.hbm_to_vmem [thread:$0]  %s1, 512, %s27, [#allocation6], 128, 128, 8
    $region9: #{classifier_forward.1} parent=1 // pred_fallthru
      _
    // Predicated region
    $region10: #{classifier_forward.1} parent=1 // pred_check
      _
    $region11: #{classifier_forward.1} parent=1 // pred_check_branch
      %34 = sbr.rel (0) target = $region13
    $region12: #{classifier_forward.1} parent=1 // pred_region
      _
    $region13: #{classifier_forward.1} parent=1 // pred_fallthru
      _
    // Predicated region
    $region14: #{classifier_forward.1} parent=1 // pred_check
      _
    $region15: #{classifier_forward.1} parent=1 // pred_check_branch
      %36 = sbr.rel (0) target = $region17
    $region16: #{classifier_forward.1} parent=1 // pred_region
      %37 = dma.done [#allocation3], 128
    $region17: #{classifier_forward.1} parent=1 // pred_fallthru
      _
    // Predicated region
    $region18: #{classifier_forward.1} parent=1 // pred_check
      _
    $region19: #{classifier_forward.1} parent=1 // pred_check_branch
      %39 = sbr.rel (0) target = $region21
    $region20: #{classifier_forward.1} parent=1 // pred_region
      %40 = dma.done [#allocation6], 512
    $region21: #{classifier_forward.1} parent=1 // pred_fallthru
      _
    %v41 = vld [vmem:[#allocation2] sm:$0xff]
    %v42 = vld [vmem:[#allocation5] sm:$0xff]
    %v43 = vld [vmem:[#allocation5 + $0x8] sm:$0xff]
    %v44 = vld [vmem:[#allocation5 + $0x10] sm:$0xff]
    %v45 = vld [vmem:[#allocation5 + $0x18] sm:$0xff]
    %v46 = vld [vmem:[%s2] sm:$0x1]
    %v48 = vlaneseq
    %v49 = vshrl.u32 %v48, 7
    %v50 = vsub.s32 0, %v49
    %v51 = vrot.slane %v46, %v50
    %vm53 = vcmask 261120
    %v55 = vsel %vm53, %v41, 0
    %57 = vmatprep.subr.mxu0 0.0
    %58 = vmatpush1.msra.mxu0 %v42
    %59 = vmatprep.subr.mxu0 0.0
    %60 = vmatpush1.msra.mxu0 %v43
    %61 = vmatprep.subr.mxu0 0.0
    %62 = vmatpush1.msra.mxu0 %v44
    %63 = vmatprep.subr.mxu0 0.0
    %64 = vmatpush1.msra.mxu0 %v45
    %65 = vmatprep.subr.mxu0 0.0
    %66 = vmatpush1.msra.mxu0 0.0
    %67 = vmatprep.subr.mxu0 0.0
    %68 = vmatpush1.msra.mxu0 0.0
    %69 = vmatprep.subr.mxu0 0.0
    %70 = vmatpush1.msra.mxu0 0.0
    %71 = vmatprep.subr.mxu0 0.0
    %72 = vmatpush1.msra.mxu0 0.0
    %73 = vmatprep.subr.mxu0 0.0
    %74 = vmatpush1.msra.mxu0 0.0
    %75 = vmatprep.subr.mxu0 0.0
    %76 = vmatpush1.msra.mxu0 0.0
    %77 = vmatprep.subr.mxu0 0.0
    %78 = vmatpush1.msra.mxu0 0.0
    %79 = vmatprep.subr.mxu0 0.0
    %80 = vmatpush1.msra.mxu0 0.0
    %81 = vmatprep.subr.mxu0 0.0
    %82 = vmatpush1.msra.mxu0 0.0
    %83 = vmatprep.subr.mxu0 0.0
    %84 = vmatpush1.msra.mxu0 0.0
    %85 = vmatprep.subr.mxu0 0.0
    %86 = vmatpush1.msra.mxu0 0.0
    %87 = vmatprep.subr.mxu0 0.0
    %88 = vmatpush1.msra.mxu0 0.0
    %89 = vmatprep.subr.mxu0 0.0
    %90 = vmatpush1.msra.mxu0 0.0
    %91 = vmatprep.subr.mxu0 0.0
    %92 = vmatpush1.msra.mxu0 0.0
    %93 = vmatprep.subr.mxu0 0.0
    %94 = vmatpush1.msra.mxu0 0.0
    %95 = vmatprep.subr.mxu0 0.0
    %96 = vmatpush1.msra.mxu0 0.0
    %97 = vmatprep.subr.mxu0 0.0
    %98 = vmatpush1.msra.mxu0 0.0
    %99 = vmatprep.subr.mxu0 0.0
    %100 = vmatpush1.msra.mxu0 0.0
    %101 = vmatprep.subr.mxu0 0.0
    %102 = vmatpush1.msra.mxu0 0.0
    %103 = vmatprep.subr.mxu0 0.0
    %104 = vmatpush1.msra.mxu0 0.0
    %105 = vmatprep.subr.mxu0 0.0
    %106 = vmatpush1.msra.mxu0 0.0
    %107 = vmatprep.subr.mxu0 0.0
    %108 = vmatpush1.msra.mxu0 0.0
    %109 = vmatprep.subr.mxu0 0.0
    %110 = vmatpush1.msra.mxu0 0.0
    %111 = vmatprep.subr.mxu0 0.0
    %112 = vmatpush1.msra.mxu0 0.0
    %113 = vmatprep.subr.mxu0 0.0
    %114 = vmatpush1.msra.mxu0 0.0
    %115 = vmatprep.subr.mxu0 0.0
    %116 = vmatpush1.msra.mxu0 0.0
    %117 = vmatprep.subr.mxu0 0.0
    %118 = vmatpush1.msra.mxu0 0.0
    %119 = vmatprep.subr.mxu0 0.0
    %120 = vmatpush1.msra.mxu0 0.0
    %121 = vmatprep.mubr.f32.mxu0 0.0
    %122 = vmatmul.mubr.f32.gmra.mrb[0].mxu0 %v55
    %v123 = vpop.f32.mrb[0].mxu0
    %v124 = vadd.f32 %v51, %v123
    %v125 = vpop.f32.mrb[0].mxu0
    %126 = vdwg.mxu0
    %127 = vst [vmem:[#allocation7] sm:$0xff] %v124
    // Predicated region
    $region22: #{classifier_forward.1} parent=1 // pred_check
      _
    $region23: #{classifier_forward.1} parent=1 // pred_check_branch
      %129 = sbr.rel (0) target = $region25
    $region24: #{classifier_forward.1} parent=1 // pred_region
      %s131 = ssub.s32 128, 128
      %132 = vsyncadd [#allocation4], %s131
      %s134 = sshll.u32 [#allocation7], 4
      %s135 = int_to_ptr.vmem [resolvable:$true] %s134
      %137 = dma.vmem_to_hbm [thread:$0]  %s135, 128, %s3, [#allocation4]
    $region25: #{classifier_forward.1} parent=1 // pred_fallthru
      _
    // Predicated region
    $region26: #{classifier_forward.1} parent=1 // pred_check
      _
    $region27: #{classifier_forward.1} parent=1 // pred_check_branch
      %139 = sbr.rel (0) target = $region29
    $region28: #{classifier_forward.1} parent=1 // pred_region
      %140 = dma.done [#allocation4], 128
    $region29: #{classifier_forward.1} parent=1 // pred_fallthru
      _
    %141 = vsyncpa [#allocation3], 1
    %142 = vsyncpa [#allocation6], 1
    %143 = vsyncpa [#allocation4], 1

</llo_original>
